<compile_context>
chip_gen: v5e
topology: v5e:2x2
jax: 0.10.0
libtpu: 0.0.40
codegen_flags: <defaults>
</compile_context>

<pallas_src>
import functools

import jax
import jax.numpy as jnp
from jax import lax
from jax.experimental import pallas as pl
from jax.experimental.pallas import tpu as pltpu

EPS = 1e-5  # nn.InstanceNorm2d default


def _round_up(x, m):
    return (x + m - 1) // m * m


def _vmem_limit_bytes():
    """Generation-aware VMEM limit: ~48 MiB on v7x (64 MiB phys), ~96 MiB on v5e/v6e."""
    try:
        cap = int(pltpu.get_tpu_info().vmem_capacity_bytes)
    except Exception:
        cap = 64 * 1024 * 1024
    return max(32 * 1024 * 1024, (cap * 3) // 4)


# ---------------------------------------------------------------------------
# Kernels
# ---------------------------------------------------------------------------

def _fused_kernel(pf_ref, w_ref, m_ref, o_ref, rhs_ref, *, cin_p, wo1, inv_n):
    """Fused conv(3x3,s2,p1) + InstanceNorm + ReLU, whole spatial slab at once.

    pf_ref : (1, 4, Cin_p, P)       stride-2 parity phases (resident per batch)
    w_ref  : (Cout_t, 9*Cin_p)      folded per-tap weights
    m_ref  : (1, Lout_pad) f32      1.0 on valid output columns
    o_ref  : (1, Cout_t, Lout_pad)  output (compute dtype)
    rhs_ref: (9*Cin_p, Lout_pad)    VMEM scratch for the one-matmul RHS
    """
    lt = rhs_ref.shape[1]
    # Assemble the RHS once: 9 shifted copies of the phase slab (the only
    # lane-misaligned reads), then a single K = 9*Cin_p MXU matmul (f32 acc).
    for kh in range(3):
        for kw in range(3):
            p = (kh % 2) * 2 + (kw % 2)
            start = (kh // 2) * wo1 + (kw // 2)
            t = kh * 3 + kw
            rhs_ref[t * cin_p:(t + 1) * cin_p, :] = pf_ref[0, p, :, pl.ds(start, lt)]
    acc = jnp.dot(w_ref[...], rhs_ref[...], preferred_element_type=jnp.float32)
    # Conv bias intentionally omitted: InstanceNorm2d (no affine) subtracts the
    # per-channel mean, so a per-channel bias cancels exactly.

    # One-pass instance-norm stats over valid positions (f32).  Note: single
    # pass s2/n - mean^2 can cancel for huge means; the clamp prevents NaNs.
    m = m_ref[...]
    accm = acc * m
    s1 = jnp.sum(accm, axis=1, keepdims=True)
    s2 = jnp.sum(accm * accm, axis=1, keepdims=True)
    mean = s1 * inv_n
    var = s2 * inv_n - mean * mean
    inv_std = lax.rsqrt(jnp.maximum(var, 0.0) + EPS)
    o_ref[0] = jnp.maximum((acc - mean) * inv_std, 0.0).astype(o_ref.dtype)


def _conv_stats_kernel(pf_ref, w_ref, m_ref, conv_ref, s1_ref, s2_ref,
                       s1_sc, s2_sc, rhs_ref, *, cin_p, wo1):
    """Pass 1 of the spatially-tiled path: conv + accumulated per-channel stats."""
    lt = rhs_ref.shape[1]
    l = pl.program_id(2)

    @pl.when(l == 0)
    def _():
        s1_sc[...] = jnp.zeros_like(s1_sc)
        s2_sc[...] = jnp.zeros_like(s2_sc)

    base = pl.multiple_of(l * lt, 128)
    for kh in range(3):
        for kw in range(3):
            p = (kh % 2) * 2 + (kw % 2)
            start = (kh // 2) * wo1 + (kw // 2)
            t = kh * 3 + kw
            rhs_ref[t * cin_p:(t + 1) * cin_p, :] = (
                pf_ref[0, p, :, pl.ds(base + start, lt)])
    acc = jnp.dot(w_ref[...], rhs_ref[...], preferred_element_type=jnp.float32)

    m = m_ref[...]
    accm = acc * m
    s1_sc[...] += jnp.sum(accm, axis=1, keepdims=True)
    s2_sc[...] += jnp.sum(accm * accm, axis=1, keepdims=True)
    conv_ref[0] = acc.astype(conv_ref.dtype)

    @pl.when(l == pl.num_programs(2) - 1)
    def _():
        s1_ref[0] = s1_sc[...]
        s2_ref[0] = s2_sc[...]


def _norm_relu_kernel(conv_ref, s1_ref, s2_ref, o_ref, *, inv_n):
    """Pass 2 of the spatially-tiled path: apply mean/inv_std + ReLU per tile."""
    acc = conv_ref[0].astype(jnp.float32)
    mean = s1_ref[0] * inv_n
    var = s2_ref[0] * inv_n - mean * mean
    inv_std = lax.rsqrt(jnp.maximum(var, 0.0) + EPS)
    o_ref[0] = jnp.maximum((acc - mean) * inv_std, 0.0).astype(o_ref.dtype)


# ---------------------------------------------------------------------------
# Wrapper
# ---------------------------------------------------------------------------

def _build_phases(x_nchw, cin_p, ho, wo, p_pad, dtype):
    """De-interleave the zero-padded input into 4 stride-2 parity phases.

    Pure layout glue (~1x input bytes).  Returns (N, 4, Cin_p, P_pad) with the
    phase index as a leading dim, Cin padded to the sublane packing and the
    flattened (Ho+1)*(Wo+1) spatial axis padded to a lane-dense P_pad.
    """
    n, cin, h, w = x_nchw.shape
    ho1, wo1 = ho + 1, wo + 1
    pad_b = 2 * ho1 - h - 1          # >= 1: every phase gets exactly Ho+1 rows
    pad_r = 2 * wo1 - w - 1
    xpad = jnp.pad(x_nchw, ((0, 0), (0, 0), (1, pad_b), (1, pad_r)))
    phases = jnp.stack([xpad[:, :, ph::2, pw::2] for ph in (0, 1) for pw in (0, 1)],
                       axis=1)                                   # (N,4,Cin,Ho1,Wo1)
    pf = phases.reshape(n, 4, cin, ho1 * wo1)
    pf = jnp.pad(pf, ((0, 0), (0, 0), (0, cin_p - cin), (0, p_pad - ho1 * wo1)))
    return pf.astype(dtype)


def conv_down_2(x_nchw, weight, bias=None, *, compute_dtype=jnp.float32,
                out_dtype=None, cout_tile=None, lout_tile=None):
    """Conv2d(k=3, s=2, p=1) + InstanceNorm2d + ReLU, NCHW in / NCHW out.

    `bias` is accepted for API parity with the PyTorch module but unused: it is
    mathematically cancelled by InstanceNorm's per-channel mean subtraction.
    compute_dtype=jnp.bfloat16 is recommended on v5e AND v6e/v7x: the MXU takes
    bf16 natively with f32 accumulation and the norm epilogue stays in f32, so
    it halves streaming HBM bytes on every generation.  Output is emitted in
    `out_dtype` (defaults to compute_dtype) to also halve writeback bytes.
    """
    del bias
    if out_dtype is None:
        out_dtype = compute_dtype
    n, cin, h, w = x_nchw.shape
    cout = weight.shape[0]
    ho = (h - 1) // 2 + 1
    wo = (w - 1) // 2 + 1
    wo1 = wo + 1
    lout = ho * wo1

    # Sublane packing of the compute dtype (8 rows for 4-byte, 16 for 2-byte).
    sub = 8 if jnp.dtype(compute_dtype).itemsize == 4 else 16
    cin_p = _round_up(cin, sub)

    # Cout tiling -> second "parallel" grid axis (per-channel stats are
    # independent across Cout tiles); keeps both v7x TensorCores busy at N=1.
    cout_p = _round_up(cout, sub)
    if cout_tile is None:
        if n >= 2 or cout_p < 16:
            cout_tile = cout_p
        else:
            cout_tile = _round_up((cout_p + 1) // 2, sub)
    cout_tile = _round_up(cout_tile, sub)
    cout_pad = _round_up(cout_p, cout_tile)
    n_co = cout_pad // cout_tile

    # Spatial (lane) tiling: fused single pass when the (Cout_t, Lout) f32
    # accumulator is modest, else a two-pass pipeline over Lout tiles.
    if lout_tile is None:
        lout_p128 = _round_up(lout, 128)
        lout_tile = lout_p128 if cout_tile * lout_p128 * 4 <= 8 * 1024 * 1024 else 2048
    lout_tile = _round_up(lout_tile, 128)
    lout_pad = _round_up(lout, lout_tile)
    n_l = lout_pad // lout_tile
    fused = (n_l == 1)

    # Phase slab length: must cover the widest shifted slice, lane-dense.
    # TODO(synk): for extreme Cin*spatial the resident phase slab itself could
    # be row-tiled with a 1-row halo; not needed at realistic shapes in bf16.
    p_pad = _round_up(lout_pad + wo1 + 2, 128)

    pf = _build_phases(x_nchw, cin_p, ho, wo, p_pad, compute_dtype)

    # Folded per-tap weights: column t*Cin_p + ci holds weight[co, ci, kh, kw]
    # with t = kh*3 + kw (matches the in-kernel RHS row order).
    w_t = jnp.transpose(weight, (0, 2, 3, 1)).reshape(cout, 9, cin)
    w_t = jnp.pad(w_t, ((0, cout_pad - cout), (0, 0), (0, cin_p - cin)))
    w_fold = w_t.reshape(cout_pad, 9 * cin_p).astype(compute_dtype)

    # 1.0 on valid output columns, 0.0 on per-row junk columns and lane padding.
    cols = jnp.arange(lout_pad, dtype=jnp.int32)
    mask = ((cols < lout) & (cols % wo1 < wo)).astype(jnp.float32).reshape(1, lout_pad)

    inv_n = 1.0 / float(ho * wo)
    vmem_limit = _vmem_limit_bytes()

    if fused:
        kernel = functools.partial(_fused_kernel, cin_p=cin_p, wo1=wo1, inv_n=inv_n)
        out_wide = pl.pallas_call(
            kernel,
            out_shape=jax.ShapeDtypeStruct((n, cout_pad, lout_pad), out_dtype),
            grid=(n, n_co),
            in_specs=[
                pl.BlockSpec((1, 4, cin_p, p_pad), lambda i, co: (i, 0, 0, 0)),
                pl.BlockSpec((cout_tile, 9 * cin_p), lambda i, co: (co, 0)),
                pl.BlockSpec((1, lout_pad), lambda i, co: (0, 0)),
            ],
            out_specs=pl.BlockSpec((1, cout_tile, lout_pad), lambda i, co: (i, co, 0)),
            scratch_shapes=[pltpu.VMEM((9 * cin_p, lout_pad), compute_dtype)],
            compiler_params=pltpu.CompilerParams(
                dimension_semantics=("parallel", "parallel"),
                vmem_limit_bytes=vmem_limit),
        )(pf, w_fold, mask)
    else:
        k1 = functools.partial(_conv_stats_kernel, cin_p=cin_p, wo1=wo1)
        conv_wide, s1, s2 = pl.pallas_call(
            k1,
            out_shape=(
                jax.ShapeDtypeStruct((n, cout_pad, lout_pad), compute_dtype),
                jax.ShapeDtypeStruct((n, cout_pad, 1), jnp.float32),
                jax.ShapeDtypeStruct((n, cout_pad, 1), jnp.float32),
            ),
            grid=(n, n_co, n_l),
            in_specs=[
                pl.BlockSpec((1, 4, cin_p, p_pad), lambda i, co, l: (i, 0, 0, 0)),
                pl.BlockSpec((cout_tile, 9 * cin_p), lambda i, co, l: (co, 0)),
                pl.BlockSpec((1, lout_tile), lambda i, co, l: (0, l)),
            ],
            out_specs=(
                pl.BlockSpec((1, cout_tile, lout_tile), lambda i, co, l: (i, co, l)),
                pl.BlockSpec((1, cout_tile, 1), lambda i, co, l: (i, co, 0)),
                pl.BlockSpec((1, cout_tile, 1), lambda i, co, l: (i, co, 0)),
            ),
            scratch_shapes=[
                pltpu.VMEM((cout_tile, 1), jnp.float32),
                pltpu.VMEM((cout_tile, 1), jnp.float32),
                pltpu.VMEM((9 * cin_p, lout_tile), compute_dtype),
            ],
            compiler_params=pltpu.CompilerParams(
                dimension_semantics=("parallel", "parallel", "arbitrary"),
                vmem_limit_bytes=vmem_limit),
        )(pf, w_fold, mask)

        k2 = functools.partial(_norm_relu_kernel, inv_n=inv_n)
        out_wide = pl.pallas_call(
            k2,
            out_shape=jax.ShapeDtypeStruct((n, cout_pad, lout_pad), out_dtype),
            grid=(n, n_co, n_l),
            in_specs=[
                pl.BlockSpec((1, cout_tile, lout_tile), lambda i, co, l: (i, co, l)),
                pl.BlockSpec((1, cout_tile, 1), lambda i, co, l: (i, co, 0)),
                pl.BlockSpec((1, cout_tile, 1), lambda i, co, l: (i, co, 0)),
            ],
            out_specs=pl.BlockSpec((1, cout_tile, lout_tile), lambda i, co, l: (i, co, l)),
            compiler_params=pltpu.CompilerParams(
                dimension_semantics=("parallel", "parallel", "parallel"),
                vmem_limit_bytes=vmem_limit),
        )(conv_wide, s1, s2)

    # Wide (N, Cout_pad, Lout_pad) -> NCHW: crop channel padding + junk columns.
    out = out_wide[:, :cout, :lout].reshape(n, cout, ho, wo1)[:, :, :, :wo]
    return out


# ---------------------------------------------------------------------------
# Reference + test
# ---------------------------------------------------------------------------

def _reference(x_nchw, weight, bias):
    """Pure-JAX reference of the PyTorch forward (includes the conv bias)."""
    y = lax.conv_general_dilated(
        x_nchw.astype(jnp.float32), weight.astype(jnp.float32),
        window_strides=(2, 2), padding=((1, 1), (1, 1)),
        dimension_numbers=("NCHW", "OIHW", "NCHW"))
    y = y + bias.reshape(1, -1, 1, 1)
    mean = jnp.mean(y, axis=(2, 3), keepdims=True)
    var = jnp.mean((y - mean) ** 2, axis=(2, 3), keepdims=True)
    y = (y - mean) * lax.rsqrt(var + EPS)
    return jnp.maximum(y, 0.0)


if __name__ == "__main__":
    # Module: Conv_down_2(in_ch=4, out_ch=4); the conv maps in_ch -> in_ch.
    in_ch = 4
    N, H, W = 2, 16, 16

    key = jax.random.PRNGKey(0)
    kx, kw_, kb, kx2 = jax.random.split(key, 4)
    x = jax.random.normal(kx, (N, in_ch, H, W), dtype=jnp.float32)
    fan_in = in_ch * 3 * 3
    weight = jax.random.normal(kw_, (in_ch, in_ch, 3, 3), dtype=jnp.float32) / jnp.sqrt(fan_in)
    bias = jax.random.normal(kb, (in_ch,), dtype=jnp.float32) * 0.01

    ref = jax.block_until_ready(_reference(x, weight, bias))

    # 1) f32, fused single-pass path (tight check; proves exact bias cancellation).
    out_f32 = jax.block_until_ready(
        jax.jit(lambda a, b, c: conv_down_2(a, b, c, compute_dtype=jnp.float32))(
            x, weight, bias))
    assert out_f32.shape == (N, in_ch, H // 2, W // 2), out_f32.shape
    assert jnp.allclose(out_f32, ref, atol=1e-4, rtol=1e-4), \
        float(jnp.max(jnp.abs(out_f32 - ref)))

    # 2) bf16 compute + bf16 output (HBM/MXU win on v5e/v6e/v7x); f32 acc + stats.
    out_bf16 = jax.block_until_ready(
        jax.jit(lambda a, b, c: conv_down_2(a, b, c, compute_dtype=jnp.bfloat16))(
            x, weight, bias))
    assert out_bf16.shape == (N, in_ch, H // 2, W // 2), out_bf16.shape
    assert out_bf16.dtype == jnp.bfloat16, out_bf16.dtype
    assert jnp.allclose(out_bf16.astype(jnp.float32), ref, atol=5e-2, rtol=5e-2), \
        float(jnp.max(jnp.abs(out_bf16.astype(jnp.float32) - ref)))

    # 3) Spatially-tiled two-pass path (forced small Lout tile to exercise it).
    x2 = jax.random.normal(kx2, (1, in_ch, 32, 32), dtype=jnp.float32)
    ref2 = jax.block_until_ready(_reference(x2, weight, bias))
    out_tiled = jax.block_until_ready(
        jax.jit(lambda a, b, c: conv_down_2(a, b, c, compute_dtype=jnp.float32,
                                            lout_tile=128))(x2, weight, bias))
    assert out_tiled.shape == (1, in_ch, 16, 16), out_tiled.shape
    assert jnp.allclose(out_tiled, ref2, atol=1e-4, rtol=1e-4), \
        float(jnp.max(jnp.abs(out_tiled - ref2)))

    print("KERNEL_OK")
</pallas_src>

<mosaic_0001>
module attributes {stable_mosaic.version = 11 : i64} {
  func.func @_fused_kernel(%arg0: i32, %arg1: i32, %arg2: memref<1x4x8x256xf32, #tpu.memory_space<vmem>>, %arg3: memref<8x72xf32, #tpu.memory_space<vmem>>, %arg4: memref<1x128xf32, #tpu.memory_space<vmem>>, %arg5: memref<1x8x128xf32, #tpu.memory_space<vmem>>, %arg6: memref<72x128xf32, #tpu.memory_space<vmem>>) attributes {dimension_semantics = [#tpu.dimension_semantics<parallel>, #tpu.dimension_semantics<parallel>], iteration_bounds = array<i64: 2, 1>, scalar_prefetch = 0 : i64, scratch_operands = 1 : i64, tpu.core_type = #tpu.core_type<tc>, window_params = [{transform_indices = @transform_0, window_bounds = array<i64: 1, 4, 8, 256>}, {transform_indices = @transform_1, window_bounds = array<i64: 8, 72>}, {pipeline_mode = #tpu.pipeline_mode<synchronous>, transform_indices = @transform_2, window_bounds = array<i64: 1, 128>}, {transform_indices = @transform_3, window_bounds = array<i64: 1, 8, 128>}]} {
    %c0 = arith.constant 0 : index
    %c0_0 = arith.constant 0 : index
    %c0_1 = arith.constant 0 : index
    %c0_2 = arith.constant 0 : index
    %0 = vector.load %arg2[%c0, %c0_0, %c0_1, %c0_2] : memref<1x4x8x256xf32, #tpu.memory_space<vmem>>, vector<1x1x8x128xf32>
    %1 = vector.shape_cast %0 : vector<1x1x8x128xf32> to vector<8x128xf32>
    %c0_3 = arith.constant 0 : index
    %c0_4 = arith.constant 0 : index
    %2 = vector.load %arg6[%c0_3, %c0_4] : memref<72x128xf32, #tpu.memory_space<vmem>>, vector<8x128xf32>
    tpu.vector_store %arg6[%c0_3, %c0_4], %1 {strides = array<i32>} : memref<72x128xf32, #tpu.memory_space<vmem>>, vector<8x128xf32>,
    %c0_5 = arith.constant 0 : index
    %c1 = arith.constant 1 : index
    %c0_6 = arith.constant 0 : index
    %c0_7 = arith.constant 0 : index
    %3 = vector.load %arg2[%c0_5, %c1, %c0_6, %c0_7] : memref<1x4x8x256xf32, #tpu.memory_space<vmem>>, vector<1x1x8x128xf32>
    %4 = vector.shape_cast %3 : vector<1x1x8x128xf32> to vector<8x128xf32>
    %c8 = arith.constant 8 : index
    %c0_8 = arith.constant 0 : index
    %5 = vector.load %arg6[%c8, %c0_8] : memref<72x128xf32, #tpu.memory_space<vmem>>, vector<8x128xf32>
    tpu.vector_store %arg6[%c8, %c0_8], %4 {strides = array<i32>} : memref<72x128xf32, #tpu.memory_space<vmem>>, vector<8x128xf32>,
    %c0_9 = arith.constant 0 : index
    %c0_10 = arith.constant 0 : index
    %c0_11 = arith.constant 0 : index
    %c1_12 = arith.constant 1 : index
    %6 = vector.load %arg2[%c0_9, %c0_10, %c0_11, %c1_12] : memref<1x4x8x256xf32, #tpu.memory_space<vmem>>, vector<1x1x8x128xf32>
    %7 = vector.shape_cast %6 : vector<1x1x8x128xf32> to vector<8x128xf32>
    %c16 = arith.constant 16 : index
    %c0_13 = arith.constant 0 : index
    %8 = vector.load %arg6[%c16, %c0_13] : memref<72x128xf32, #tpu.memory_space<vmem>>, vector<8x128xf32>
    tpu.vector_store %arg6[%c16, %c0_13], %7 {strides = array<i32>} : memref<72x128xf32, #tpu.memory_space<vmem>>, vector<8x128xf32>,
    %c0_14 = arith.constant 0 : index
    %c2 = arith.constant 2 : index
    %c0_15 = arith.constant 0 : index
    %c0_16 = arith.constant 0 : index
    %9 = vector.load %arg2[%c0_14, %c2, %c0_15, %c0_16] : memref<1x4x8x256xf32, #tpu.memory_space<vmem>>, vector<1x1x8x128xf32>
    %10 = vector.shape_cast %9 : vector<1x1x8x128xf32> to vector<8x128xf32>
    %c24 = arith.constant 24 : index
    %c0_17 = arith.constant 0 : index
    %11 = vector.load %arg6[%c24, %c0_17] : memref<72x128xf32, #tpu.memory_space<vmem>>, vector<8x128xf32>
    tpu.vector_store %arg6[%c24, %c0_17], %10 {strides = array<i32>} : memref<72x128xf32, #tpu.memory_space<vmem>>, vector<8x128xf32>,
    %c0_18 = arith.constant 0 : index
    %c3 = arith.constant 3 : index
    %c0_19 = arith.constant 0 : index
    %c0_20 = arith.constant 0 : index
    %12 = vector.load %arg2[%c0_18, %c3, %c0_19, %c0_20] : memref<1x4x8x256xf32, #tpu.memory_space<vmem>>, vector<1x1x8x128xf32>
    %13 = vector.shape_cast %12 : vector<1x1x8x128xf32> to vector<8x128xf32>
    %c32 = arith.constant 32 : index
    %c0_21 = arith.constant 0 : index
    %14 = vector.load %arg6[%c32, %c0_21] : memref<72x128xf32, #tpu.memory_space<vmem>>, vector<8x128xf32>
    tpu.vector_store %arg6[%c32, %c0_21], %13 {strides = array<i32>} : memref<72x128xf32, #tpu.memory_space<vmem>>, vector<8x128xf32>,
    %c0_22 = arith.constant 0 : index
    %c2_23 = arith.constant 2 : index
    %c0_24 = arith.constant 0 : index
    %c1_25 = arith.constant 1 : index
    %15 = vector.load %arg2[%c0_22, %c2_23, %c0_24, %c1_25] : memref<1x4x8x256xf32, #tpu.memory_space<vmem>>, vector<1x1x8x128xf32>
    %16 = vector.shape_cast %15 : vector<1x1x8x128xf32> to vector<8x128xf32>
    %c40 = arith.constant 40 : index
    %c0_26 = arith.constant 0 : index
    %17 = vector.load %arg6[%c40, %c0_26] : memref<72x128xf32, #tpu.memory_space<vmem>>, vector<8x128xf32>
    tpu.vector_store %arg6[%c40, %c0_26], %16 {strides = array<i32>} : memref<72x128xf32, #tpu.memory_space<vmem>>, vector<8x128xf32>,
    %c0_27 = arith.constant 0 : index
    %c0_28 = arith.constant 0 : index
    %c0_29 = arith.constant 0 : index
    %c9 = arith.constant 9 : index
    %18 = vector.load %arg2[%c0_27, %c0_28, %c0_29, %c9] : memref<1x4x8x256xf32, #tpu.memory_space<vmem>>, vector<1x1x8x128xf32>
    %19 = vector.shape_cast %18 : vector<1x1x8x128xf32> to vector<8x128xf32>
    %c48 = arith.constant 48 : index
    %c0_30 = arith.constant 0 : index
    %20 = vector.load %arg6[%c48, %c0_30] : memref<72x128xf32, #tpu.memory_space<vmem>>, vector<8x128xf32>
    tpu.vector_store %arg6[%c48, %c0_30], %19 {strides = array<i32>} : memref<72x128xf32, #tpu.memory_space<vmem>>, vector<8x128xf32>,
    %c0_31 = arith.constant 0 : index
    %c1_32 = arith.constant 1 : index
    %c0_33 = arith.constant 0 : index
    %c9_34 = arith.constant 9 : index
    %21 = vector.load %arg2[%c0_31, %c1_32, %c0_33, %c9_34] : memref<1x4x8x256xf32, #tpu.memory_space<vmem>>, vector<1x1x8x128xf32>
    %22 = vector.shape_cast %21 : vector<1x1x8x128xf32> to vector<8x128xf32>
    %c56 = arith.constant 56 : index
    %c0_35 = arith.constant 0 : index
    %23 = vector.load %arg6[%c56, %c0_35] : memref<72x128xf32, #tpu.memory_space<vmem>>, vector<8x128xf32>
    tpu.vector_store %arg6[%c56, %c0_35], %22 {strides = array<i32>} : memref<72x128xf32, #tpu.memory_space<vmem>>, vector<8x128xf32>,
    %c0_36 = arith.constant 0 : index
    %c0_37 = arith.constant 0 : index
    %c0_38 = arith.constant 0 : index
    %c10 = arith.constant 10 : index
    %24 = vector.load %arg2[%c0_36, %c0_37, %c0_38, %c10] : memref<1x4x8x256xf32, #tpu.memory_space<vmem>>, vector<1x1x8x128xf32>
    %25 = vector.shape_cast %24 : vector<1x1x8x128xf32> to vector<8x128xf32>
    %c64 = arith.constant 64 : index
    %c0_39 = arith.constant 0 : index
    %26 = vector.load %arg6[%c64, %c0_39] : memref<72x128xf32, #tpu.memory_space<vmem>>, vector<8x128xf32>
    tpu.vector_store %arg6[%c64, %c0_39], %25 {strides = array<i32>} : memref<72x128xf32, #tpu.memory_space<vmem>>, vector<8x128xf32>,
    %c0_40 = arith.constant 0 : index
    %c0_41 = arith.constant 0 : index
    %27 = vector.load %arg3[%c0_40, %c0_41] : memref<8x72xf32, #tpu.memory_space<vmem>>, vector<8x72xf32>
    %c0_42 = arith.constant 0 : index
    %c0_43 = arith.constant 0 : index
    %28 = vector.load %arg6[%c0_42, %c0_43] : memref<72x128xf32, #tpu.memory_space<vmem>>, vector<72x128xf32>
    %cst = arith.constant dense<0.000000e+00> : vector<8x128xf32>
    %29 = tpu.matmul %27, %28, %cst {dimension_numbers = #tpu.dot_dimension_numbers<[1], [0], [0], [1], [0, 0, 1, 1], [], []>} : vector<8x72xf32>, vector<72x128xf32>, vector<8x128xf32> -> vector<8x128xf32>
    %c0_44 = arith.constant 0 : index
    %c0_45 = arith.constant 0 : index
    %30 = vector.load %arg4[%c0_44, %c0_45] : memref<1x128xf32, #tpu.memory_space<vmem>>, vector<1x128xf32>
    %31 = vector.broadcast %30 : vector<1x128xf32> to vector<8x128xf32>
    %32 = arith.mulf %29, %31 : vector<8x128xf32>
    %cst_46 = arith.constant dense<0.000000e+00> : vector<8xf32>
    %33 = vector.multi_reduction <add>, %32, %cst_46 [1] : vector<8x128xf32> to vector<8xf32>
    %34 = vector.shape_cast %33 : vector<8xf32> to vector<8x1xf32>
    %35 = arith.mulf %32, %32 : vector<8x128xf32>
    %cst_47 = arith.constant dense<0.000000e+00> : vector<8xf32>
    %36 = vector.multi_reduction <add>, %35, %cst_47 [1] : vector<8x128xf32> to vector<8xf32>
    %37 = vector.shape_cast %36 : vector<8xf32> to vector<8x1xf32>
    %cst_48 = arith.constant 1.562500e-02 : f32
    %38 = vector.broadcast %cst_48 : f32 to vector<8x1xf32>
    %39 = arith.mulf %34, %38 : vector<8x1xf32>
    %cst_49 = arith.constant 1.562500e-02 : f32
    %40 = vector.broadcast %cst_49 : f32 to vector<8x1xf32>
    %41 = arith.mulf %37, %40 : vector<8x1xf32>
    %42 = arith.mulf %39, %39 : vector<8x1xf32>
    %43 = arith.subf %41, %42 : vector<8x1xf32>
    %cst_50 = arith.constant 0.000000e+00 : f32
    %44 = vector.broadcast %cst_50 : f32 to vector<8x1xf32>
    %45 = arith.maximumf %43, %44 : vector<8x1xf32>
    %cst_51 = arith.constant 9.99999974E-6 : f32
    %46 = vector.broadcast %cst_51 : f32 to vector<8x1xf32>
    %47 = arith.addf %45, %46 : vector<8x1xf32>
    %48 = math.rsqrt %47 : vector<8x1xf32>
    %49 = vector.broadcast %39 : vector<8x1xf32> to vector<8x128xf32>
    %50 = arith.subf %29, %49 : vector<8x128xf32>
    %51 = vector.broadcast %48 : vector<8x1xf32> to vector<8x128xf32>
    %52 = arith.mulf %50, %51 : vector<8x128xf32>
    %cst_52 = arith.constant 0.000000e+00 : f32
    %53 = vector.broadcast %cst_52 : f32 to vector<8x128xf32>
    %54 = arith.maximumf %52, %53 : vector<8x128xf32>
    %c0_53 = arith.constant 0 : index
    %c0_54 = arith.constant 0 : index
    %c0_55 = arith.constant 0 : index
    %55 = vector.load %arg5[%c0_53, %c0_54, %c0_55] : memref<1x8x128xf32, #tpu.memory_space<vmem>>, vector<1x8x128xf32>
    %56 = vector.shape_cast %55 : vector<1x8x128xf32> to vector<8x128xf32>
    %57 = vector.shape_cast %54 : vector<8x128xf32> to vector<1x8x128xf32>
    tpu.vector_store %arg5[%c0_53, %c0_54, %c0_55], %57 {strides = array<i32>} : memref<1x8x128xf32, #tpu.memory_space<vmem>>, vector<1x8x128xf32>,
    return
  }
  func.func @transform_0(%arg0: i32, %arg1: i32) -> (i32, i32, i32, i32) {
    %c0_i32 = arith.constant 0 : i32
    %c0_i32_0 = arith.constant 0 : i32
    %c0_i32_1 = arith.constant 0 : i32
    %c0_i32_2 = arith.constant 0 : i32
    return %arg0, %c0_i32, %c0_i32_0, %c0_i32_1 : i32, i32, i32, i32
  }
  func.func @transform_1(%arg0: i32, %arg1: i32) -> (i32, i32) {
    %c0_i32 = arith.constant 0 : i32
    %c0_i32_0 = arith.constant 0 : i32
    return %arg1, %c0_i32 : i32, i32
  }
  func.func @transform_2(%arg0: i32, %arg1: i32) -> (i32, i32) {
    %c0_i32 = arith.constant 0 : i32
    %c0_i32_0 = arith.constant 0 : i32
    %c0_i32_1 = arith.constant 0 : i32
    return %c0_i32, %c0_i32_0 : i32, i32
  }
  func.func @transform_3(%arg0: i32, %arg1: i32) -> (i32, i32, i32) {
    %c0_i32 = arith.constant 0 : i32
    %c0_i32_0 = arith.constant 0 : i32
    return %arg0, %arg1, %c0_i32 : i32, i32, i32
  }
}

</mosaic_0001>

<llo_original>
// kernel: _lambda_.1
$region0: #{_lambda_.1}
  #allocation0 [shape = 'u32[]', space=smem, size = 0x4, offset = 0x4, fixed_abs, tag = 'smem constant byte address 0x4 - core index']
  #allocation1 [shape = 'u32[72,128]{1,0:T(1,128)}', space=vmem, size = 0x9000, scoped, tag = 'internal scratch']
  #allocation2 [shape = 'f32[72,128]{1,0:T(8,128)}', space=vmem, size = 0x9000, scoped, tag = 'scratch operand']
  %s0 = inlined_call_operand.vmem [shape: f32[2,4,8,256], index: 0, kind: input, shape index: {}]
  %s1 = inlined_call_operand.vmem [shape: f32[8,72], index: 1, kind: input, shape index: {}]
  %s2 = inlined_call_operand.vmem [shape: f32[1,128], index: 2, kind: input, shape index: {}]
  %s3 = inlined_call_operand.vmem [shape: f32[2,8,128], index: 3, kind: output, shape index: {}]
  %s4 = sld [smem:[#allocation0]]
  $region45: #{_lambda_.1} parent=0
    _
  %s6 = ssub.s32 1, %s4
  %s7 = scalar_select 0, %s6, %s4
  loop: start=0, step=1, limit=4
  $region2: #{_lambda_.1} parent=0 // loop_pre_header
    _
  $region3: #{_lambda_.1} parent=0 // loop_header
    %s9 = sphi 0, %s13
    %p10 = scmp.ge.s32.totalorder %s9, 4
    %s16 = sphi 0, %s28
    %s17 = sphi 0, %s24
    %s18 = sphi 0, %s16
    %s19 = sphi 0, %s17
    %s20 = sphi 0, %s18
    %s21 = sphi 0, %s19
    %s31 = sphi 0, %s33
    %s34 = sphi 0, %s31
    %s35 = sphi 0, %s34
    %s51 = sphi 0, %s35
    %s57 = sphi 0, %s59
    %s60 = sphi 0, %s57
    %s61 = sphi 0, %s60
    %s77 = sphi 0, %s61
    %s81 = sphi 0, %s81
    %s83 = sphi 0, %s81
    %s84 = sphi 0, %s83
    %s98 = sphi 0, %s84
    %s106 = sphi 0, %s108
    %s109 = sphi 0, %s106
    %s110 = sphi 0, %s109
    %s126 = sphi 0, %s110
  $region4: #{_lambda_.1} parent=0 // loop_header_branch
    %12 = sbr.rel (%p10) target = $region8
  $region5: #{_lambda_.1} parent=0 // loop_body
    %s14 = ssub.s32 %s9, 1
    %s15 = ssub.s32 %s9, 2
    %s22 = sadd.s32 1, %s17
    %p23 = scmp.ge.s32.totalorder %s22, 1
    %s24 = scalar_select %p23, 0, %s22
    %s25 = sadd.s32 1, %s16
    %s26 = scalar_select %p23, %s25, %s16
    %p27 = scmp.ge.s32.totalorder %s26, 2
    %s28 = scalar_select %p27, 0, %s26
    %s29 = ssub.s32 %s16, %s28
    %p30 = scmp.eq.s32.totalorder %s29, 0
    %s32 = sadd.s32 %s31, 1
    %s33 = scalar_select %p30, %s31, %s32
    %p36 = pneg %p30
    %p37 = scmp.eq.s32.totalorder %s9, 1
    %p38 = por %p36, %p37
    %p39 = scmp.ne.s32.totalorder %s31, %s34
    %p40 = scmp.eq.s32.totalorder %s9, 0
    %p41 = por %p39, %p40
    %p42 = scmp.ne.s32.totalorder %s31, %s34
    %p43 = scmp.eq.s32.totalorder %s14, 1
    %p44 = por %p42, %p43
    %p45 = scmp.ne.s32.totalorder %s34, %s35
    %p46 = scmp.eq.s32.totalorder %s14, 0
    %p47 = por %p45, %p46
    %p48 = scmp.ne.s32.totalorder %s34, %s35
    %p49 = scmp.eq.s32.totalorder %s15, 1
    %p50 = por %p48, %p49
    %p52 = scmp.ne.s32.totalorder %s35, %s51
    %p53 = scmp.eq.s32.totalorder %s15, 0
    %p54 = por %p52, %p53
    %s55 = ssub.s32 %s17, %s24
    %p56 = scmp.eq.s32.totalorder %s55, 0
    %s58 = sadd.s32 %s57, 1
    %s59 = scalar_select %p56, %s57, %s58
    %p62 = pneg %p56
    %p63 = scmp.eq.s32.totalorder %s9, 1
    %p64 = por %p62, %p63
    %p65 = scmp.ne.s32.totalorder %s57, %s60
    %p66 = scmp.eq.s32.totalorder %s9, 0
    %p67 = por %p65, %p66
    %p68 = scmp.ne.s32.totalorder %s57, %s60
    %p69 = scmp.eq.s32.totalorder %s14, 1
    %p70 = por %p68, %p69
    %p71 = scmp.ne.s32.totalorder %s60, %s61
    %p72 = scmp.eq.s32.totalorder %s14, 0
    %p73 = por %p71, %p72
    %p74 = scmp.ne.s32.totalorder %s60, %s61
    %p75 = scmp.eq.s32.totalorder %s15, 1
    %p76 = por %p74, %p75
    %p78 = scmp.ne.s32.totalorder %s61, %s77
    %p79 = scmp.eq.s32.totalorder %s15, 0
    %p80 = por %p78, %p79
    %s82 = sadd.s32 %s81, 1
    %p85 = scmp.eq.s32.totalorder %s9, 1
    %p86 = scmp.ne.s32.totalorder %s81, %s83
    %p87 = scmp.eq.s32.totalorder %s9, 0
    %p88 = por %p86, %p87
    %p89 = scmp.ne.s32.totalorder %s81, %s83
    %p90 = scmp.eq.s32.totalorder %s14, 1
    %p91 = por %p89, %p90
    %p92 = scmp.ne.s32.totalorder %s83, %s84
    %p93 = scmp.eq.s32.totalorder %s14, 0
    %p94 = por %p92, %p93
    %p95 = scmp.ne.s32.totalorder %s83, %s84
    %p96 = scmp.eq.s32.totalorder %s15, 1
    %p97 = por %p95, %p96
    %p99 = scmp.ne.s32.totalorder %s84, %s98
    %p100 = scmp.eq.s32.totalorder %s15, 0
    %p101 = por %p99, %p100
    %s102 = ssub.s32 %s16, %s28
    %s103 = ssub.s32 %s17, %s24
    %s104 = sor.u32 %s102, %s103
    %p105 = scmp.eq.s32.totalorder %s104, 0
    %s107 = sadd.s32 %s106, 1
    %s108 = scalar_select %p105, %s106, %s107
    %p111 = pneg %p105
    %p112 = scmp.eq.s32.totalorder %s9, 1
    %p113 = por %p111, %p112
    %p114 = scmp.ne.s32.totalorder %s106, %s109
    %p115 = scmp.eq.s32.totalorder %s9, 0
    %p116 = por %p114, %p115
    %p117 = scmp.ne.s32.totalorder %s106, %s109
    %p118 = scmp.eq.s32.totalorder %s14, 1
    %p119 = por %p117, %p118
    %p120 = scmp.ne.s32.totalorder %s109, %s110
    %p121 = scmp.eq.s32.totalorder %s14, 0
    %p122 = por %p120, %p121
    %p123 = scmp.ne.s32.totalorder %s109, %s110
    %p124 = scmp.eq.s32.totalorder %s15, 1
    %p125 = por %p123, %p124
    %p127 = scmp.ne.s32.totalorder %s110, %s126
    %p128 = scmp.eq.s32.totalorder %s15, 0
    %p129 = por %p127, %p128
    %p130 = scmp.le.s32.totalorder 1, %s9
    %p131 = scmp.lt.s32.totalorder %s9, 3
    %p132 = pnand %p130, %p131
    %p133 = pneg %p132
    // Predicated region
    $region9: #{_lambda_.1} parent=5 // pred_check
      _
    $region10: #{_lambda_.1} parent=5 // pred_check_branch
      %135 = sbr.rel (%p132) target = $region12
    $region11: #{_lambda_.1} parent=5 // pred_region
      %s136 = ssub.s32 %s9, 1
      // Predicated region
      $region13: #{_lambda_.1} parent=11 // pred_check
        %p137 = pneg %p73
      $region14: #{_lambda_.1} parent=11 // pred_check_branch
        %139 = sbr.rel (%p137) target = $region16
      $region15: #{_lambda_.1} parent=11 // pred_region
        %p140 = scmp.lt.s32.totalorder %s19, 0
        %s141 = scalar_select %p140, %s19, 0
        %s142 = smul.addr %s141, 8
        %s143 = scalar_lea.vmem %s1, %s142
      $region16: #{_lambda_.1} parent=11 // pred_fallthru
        _
      // Predicated region
      $region17: #{_lambda_.1} parent=11 // pred_check
        %p144 = pneg %p94
      $region18: #{_lambda_.1} parent=11 // pred_check_branch
        %146 = sbr.rel (%p144) target = $region20
      $region19: #{_lambda_.1} parent=11 // pred_region
        _
      $region20: #{_lambda_.1} parent=11 // pred_fallthru
        _
    $region12: #{_lambda_.1} parent=5 // pred_fallthru
      _
    %p147 = scmp.lt.s32.totalorder %s9, 2
    // Predicated region
    $region21: #{_lambda_.1} parent=5 // pred_check
      %p148 = pneg %p147
    $region22: #{_lambda_.1} parent=5 // pred_check_branch
      %150 = sbr.rel (%p148) target = $region24
    $region23: #{_lambda_.1} parent=5 // pred_region
      // Predicated region
      $region25: #{_lambda_.1} parent=23 // pred_check
        %p151 = pneg %p41
      $region26: #{_lambda_.1} parent=23 // pred_check_branch
        %153 = sbr.rel (%p151) target = $region28
      $region27: #{_lambda_.1} parent=23 // pred_region
        %p154 = scmp.lt.s32.totalorder %s16, 1
        %s155 = scalar_select %p154, %s16, 1
        %s156 = smul.addr %s155, 8
        %s157 = smul.addr %s156, 8
        %s158 = scalar_lea.vmem %s0, %s157
      $region28: #{_lambda_.1} parent=23 // pred_fallthru
        _
    $region24: #{_lambda_.1} parent=5 // pred_fallthru
      _
    %p159 = scmp.le.s32.totalorder 1, %s9
    %p160 = scmp.lt.s32.totalorder %s9, 3
    %p161 = pnand %p159, %p160
    %p162 = pneg %p161
    // Predicated region
    $region29: #{_lambda_.1} parent=5 // pred_check
      _
    $region30: #{_lambda_.1} parent=5 // pred_check_branch
      %164 = sbr.rel (%p161) target = $region32
    $region31: #{_lambda_.1} parent=5 // pred_region
      %s165 = ssub.s32 %s9, 1
      %p166 = scmp.lt.s32.totalorder %s18, 1
      %s167 = scalar_select %p166, %s18, 1
      %s168 = smul.addr %s167, 8
      %s169 = smul.addr %s168, 8
      %s170 = scalar_lea.vmem %s0, %s169
      %p171 = pneg %p47
      %p172 = pneg %p44
      %p173 = scmp.lt.s32.totalorder %s19, 0
      %s174 = scalar_select %p173, %s19, 0
      %s175 = smul.addr %s174, 8
      %s176 = scalar_lea.vmem %s1, %s175
      %p177 = pneg %p73
      %p178 = pneg %p70
      %p179 = pneg %p94
      %p180 = pneg %p91
      %p181 = pneg %p122
      %p182 = pneg %p119
      %p183 = scmp.lt.s32.totalorder %s18, 1
      %s184 = scalar_select %p183, %s18, 1
      %p185 = scmp.lt.s32.totalorder %s19, 0
      %s186 = scalar_select %p185, %s19, 0
      %s187 = sadd.s32 %s186, %s184
      %s188 = smul.addr %s187, 8
      %s189 = scalar_lea.vmem %s3, %s188
      %p190 = scmp.lt.s32.totalorder %s18, 1
      %s191 = scalar_select %p190, %s18, 1
      %s192 = smul.addr %s191, 8
      %s193 = smul.addr %s192, 8
      %s194 = scalar_lea.vmem %s0, %s193
      %p195 = scmp.lt.s32.totalorder %s19, 0
      %s196 = scalar_select %p195, %s19, 0
      %s197 = smul.addr %s196, 8
      %s198 = scalar_lea.vmem %s1, %s197
      %p199 = scmp.lt.s32.totalorder %s18, 1
      %s200 = scalar_select %p199, %s18, 1
      %p201 = scmp.lt.s32.totalorder %s19, 0
      %s202 = scalar_select %p201, %s19, 0
      %s203 = sadd.s32 %s202, %s200
      %s204 = smul.addr %s203, 8
      %s205 = scalar_lea.vmem %s3, %s204
      %v206 = vld [vmem:[%s194] sm:$0xff]
      %207 = vst [vmem:[#allocation2] sm:$0xff] %v206
      %s208 = scalar_lea.vmem %s194, 16
      %v209 = vld [vmem:[%s208] sm:$0xff]
      %210 = vst [vmem:[#allocation2 + $0x8] sm:$0xff] %v209
      %v211 = vld [vmem:[%s194] sm:$0xff]
      %v212 = vld [vmem:[%s194 + $0x8] sm:$0xff]
      %215 = vrot.lane.b32.xlu0 %v211, 127
      %v216 = vpop.permute.xlu0 %215
      %217 = vrot.lane.b32.xlu0 %v212, 127
      %v218 = vpop.permute.xlu0 %217
      %vm219 = vcmask 1039360
      %v220 = vsel %vm219, %v216, %v218
      %222 = vst [vmem:[#allocation2 + $0x10] sm:$0xff] %v220
      %s223 = scalar_lea.vmem %s194, 32
      %v224 = vld [vmem:[%s223] sm:$0xff]
      %225 = vst [vmem:[#allocation2 + $0x18] sm:$0xff] %v224
      %s226 = scalar_lea.vmem %s194, 48
      %v227 = vld [vmem:[%s226] sm:$0xff]
      %228 = vst [vmem:[#allocation2 + $0x20] sm:$0xff] %v227
      %v229 = vld [vmem:[%s223] sm:$0xff]
      %v230 = vld [vmem:[%s223 + $0x8] sm:$0xff]
      %233 = vrot.lane.b32.xlu0 %v229, 127
      %v234 = vpop.permute.xlu0 %233
      %235 = vrot.lane.b32.xlu0 %v230, 127
      %v236 = vpop.permute.xlu0 %235
      %v237 = vsel %vm219, %v234, %v236
      %239 = vst [vmem:[#allocation2 + $0x28] sm:$0xff] %v237
      %v240 = vld [vmem:[%s194] sm:$0xff]
      %v241 = vld [vmem:[%s194 + $0x8] sm:$0xff]
      %244 = vrot.lane.b32.xlu0 %v240, 119
      %v245 = vpop.permute.xlu0 %244
      %246 = vrot.lane.b32.xlu0 %v241, 119
      %v247 = vpop.permute.xlu0 %246
      %vm248 = vcmask 973824
      %v249 = vsel %vm248, %v245, %v247
      %251 = vst [vmem:[#allocation2 + $0x30] sm:$0xff] %v249
      %v252 = vld [vmem:[%s208] sm:$0xff]
      %v253 = vld [vmem:[%s208 + $0x8] sm:$0xff]
      %256 = vrot.lane.b32.xlu0 %v252, 119
      %v257 = vpop.permute.xlu0 %256
      %258 = vrot.lane.b32.xlu0 %v253, 119
      %v259 = vpop.permute.xlu0 %258
      %v260 = vsel %vm248, %v257, %v259
      %262 = vst [vmem:[#allocation2 + $0x38] sm:$0xff] %v260
      %v263 = vld [vmem:[%s194] sm:$0xff]
      %v264 = vld [vmem:[%s194 + $0x8] sm:$0xff]
      %267 = vrot.lane.b32.xlu0 %v263, 118
      %v268 = vpop.permute.xlu0 %267
      %269 = vrot.lane.b32.xlu0 %v264, 118
      %v270 = vpop.permute.xlu0 %269
      %vm271 = vcmask 965632
      %v272 = vsel %vm271, %v268, %v270
      %274 = vst [vmem:[#allocation2 + $0x40] sm:$0xff] %v272
      %v275 = vld [vmem:[%s198] sm:$0xff]
      %v276 = vld [vmem:[#allocation2] sm:$0xff]
      %v277 = vld [vmem:[#allocation2 + $0x8] sm:$0xff]
      %v278 = vld [vmem:[#allocation2 + $0x10] sm:$0xff]
      %v279 = vld [vmem:[#allocation2 + $0x18] sm:$0xff]
      %v280 = vld [vmem:[#allocation2 + $0x20] sm:$0xff]
      %v281 = vld [vmem:[#allocation2 + $0x28] sm:$0xff]
      %v282 = vld [vmem:[#allocation2 + $0x30] sm:$0xff]
      %v283 = vld [vmem:[#allocation2 + $0x38] sm:$0xff]
      %v284 = vld [vmem:[#allocation2 + $0x40] sm:$0xff]
      %vm285 = vcmask 588800
      %v287 = vsel %vm285, %v275, 0
      %289 = vmatpush.msra.mxu0 0.0
      %290 = vmatpush.msra.mxu0 0.0
      %291 = vmatpush.msra.mxu0 0.0
      %292 = vmatpush.msra.mxu0 0.0
      %293 = vmatpush.msra.mxu0 0.0
      %294 = vmatpush.msra.mxu0 0.0
      %295 = vmatpush.msra.mxu0 0.0
      %296 = vmatpush.msra.mxu0 %v284
      %297 = vmatpush.msra.mxu0 %v283
      %298 = vmatpush.msra.mxu0 %v282
      %299 = vmatpush.msra.mxu0 %v281
      %300 = vmatpush.msra.mxu0 %v280
      %301 = vmatpush.msra.mxu0 %v279
      %302 = vmatpush.msra.mxu0 %v278
      %303 = vmatpush.msra.mxu0 %v277
      %304 = vmatpush.msra.mxu0 %v276
      %305 = vmatmul.f32.gmra.mxu0 %v287
      %v306 = vpop.f32.mrf.mxu0
      %v307 = vadd.f32 0.0, %v306
      %308 = vdwg.mxu0
      %v309 = vld [vmem:[%s2] sm:$0x1]
      %v311 = vperm.slane %v309, 0
      %v313 = vmul.f32 %v307, %v311
      %314 = vadd.xlane.f32.xlu0 %v313
      %v315 = vpop.xlane.xlu0 %314
      %v316 = vmul.f32 %v313, %v313
      %317 = vadd.xlane.f32.xlu0 %v316
      %v318 = vpop.xlane.xlu0 %317
      %v319 = vmul.f32 %v315, 0.015625
      %v320 = vmul.f32 %v318, 0.015625
      %v321 = vmul.f32 %v319, %v319
      %v322 = vsub.f32 %v320, %v321
      %v323 = vmax.f32 %v322, 0.0
      %v324 = vadd.f32 %v323, 1e-05
      %v325 = vrsqrt.pop %v324
      %v326 = vmul.f32 %v325, %v324
      %v327 = vmul.f32 %v326, %v325
      %v328 = vmul.f32 0.5, %v327
      %v329 = vsub.f32 1.5, %v328
      %v330 = vmul.f32 %v325, %v329
      %vm331 = vweird.f32 %v324
      %vm332 = vweird.f32 %v325
      %vm333 = vmor %vm331, %vm332
      %v334 = vsel %vm333, %v325, %v330
      %v335 = vsub.f32 %v307, %v319
      %v336 = vmul.f32 %v335, %v334
      %v337 = vmax.f32 %v336, 0.0
      %338 = vst [vmem:[%s205] sm:$0xff] %v337
      %p339 = scmp.lt.s32.totalorder %s18, 1
      %s340 = scalar_select %p339, %s18, 1
      %p341 = scmp.lt.s32.totalorder %s19, 0
      %s342 = scalar_select %p341, %s19, 0
      %s343 = sadd.s32 %s342, %s340
      %s344 = smul.addr %s343, 8
      %s345 = scalar_lea.vmem %s3, %s344
      // Predicated region
      $region33: #{_lambda_.1} parent=31 // pred_check
        %p346 = pneg %p119
      $region34: #{_lambda_.1} parent=31 // pred_check_branch
        %348 = sbr.rel (%p346) target = $region36
      $region35: #{_lambda_.1} parent=31 // pred_region
        _
      $region36: #{_lambda_.1} parent=31 // pred_fallthru
        _
    $region32: #{_lambda_.1} parent=5 // pred_fallthru
      _
    %p349 = scmp.le.s32.totalorder 2, %s9
    // Predicated region
    $region37: #{_lambda_.1} parent=5 // pred_check
      %p350 = pneg %p349
    $region38: #{_lambda_.1} parent=5 // pred_check_branch
      %352 = sbr.rel (%p350) target = $region40
    $region39: #{_lambda_.1} parent=5 // pred_region
      %s353 = ssub.s32 %s9, 2
      // Predicated region
      $region41: #{_lambda_.1} parent=39 // pred_check
        %p354 = pneg %p125
      $region42: #{_lambda_.1} parent=39 // pred_check_branch
        %356 = sbr.rel (%p354) target = $region44
      $region43: #{_lambda_.1} parent=39 // pred_region
        %p357 = scmp.lt.s32.totalorder %s20, 1
        %s358 = scalar_select %p357, %s20, 1
        %p359 = scmp.lt.s32.totalorder %s21, 0
        %s360 = scalar_select %p359, %s21, 0
        %s361 = sadd.s32 %s360, %s358
        %s362 = smul.addr %s361, 8
        %s363 = scalar_lea.vmem %s3, %s362
      $region44: #{_lambda_.1} parent=39 // pred_fallthru
        _
    $region40: #{_lambda_.1} parent=5 // pred_fallthru
      _
  $region6: #{_lambda_.1} parent=0 // loop_footer
    %s13 = sadd.s32 1, %s9
  $region7: #{_lambda_.1} parent=0 // loop_footer_branch
    %8 = sbr.rel target = $region3
  $region8: #{_lambda_.1} parent=0 // loop_exit
    _

</llo_original>
